<compile_context>
chip_gen: v7x
topology: tpu7x:2x2x1
jax: 0.10.0
libtpu: 0.0.40
codegen_flags: <defaults>
</compile_context>

<pallas_src>
import jax
import jax.numpy as jnp
from jax.experimental import pallas as pl
from jax.experimental.pallas import tpu as pltpu


def _round_up(x, m):
    return (x + m - 1) // m * m


def linear_softmax_kernel(x_ref, w_ref, bias_ref, o_ref, acc_ref):
    # x_ref: (tile_b, tile_k) compute_dtype, w_ref: (tile_k, O_pad) compute_dtype,
    # bias_ref: (1, O_pad) f32 additive column mask, o_ref: (tile_b, O_pad) out dtype,
    # acc_ref: (tile_b, O_pad) f32 scratch accumulator.
    k = pl.program_id(1)

    @pl.when(k == 0)
    def _init():
        # Seed the accumulator with the column mask (0 for real output columns,
        # -1e30 for padded ones) -> no separate mask op in the epilogue.
        acc_ref[...] = jnp.broadcast_to(bias_ref[...], acc_ref.shape)

    acc_ref[...] += jnp.dot(
        x_ref[...], w_ref[...], preferred_element_type=jnp.float32
    )

    @pl.when(k == pl.num_programs(1) - 1)
    def _finalize():
        h = acc_ref[...]
        # Numerically-stable softmax along dim=1, all in f32.
        m = jnp.max(h, axis=1, keepdims=True)
        e = jnp.exp(h - m)
        s = jnp.sum(e, axis=1, keepdims=True)
        # Exact division (not the approx reciprocal) so rows sum to 1 exactly
        # up to f32 rounding.
        o_ref[...] = (e / s).astype(o_ref.dtype)


def neural_net_forward(x, weight, *, tile_b=None, tile_k_cap=2048,
                       compute_dtype=jnp.bfloat16):
    """Forward of NeuralNet: softmax(x @ weight.T, axis=1).

    x: (B, V) float32, weight: (O, V) float32 (nn.Linear.weight layout).
    Matmul operands are cast to `compute_dtype` (bf16 by default) for MXU
    throughput; accumulation and softmax stay in f32; output is x.dtype.
    """
    B, V = x.shape
    O, V2 = weight.shape
    assert V == V2
    out_dtype = x.dtype
    in_itemsize = jnp.dtype(compute_dtype).itemsize

    # --- Tiling -------------------------------------------------------------
    O_pad = _round_up(O, 128)
    V_pad = _round_up(V, 128)
    num_k = pl.cdiv(V_pad, tile_k_cap)
    tile_k = _round_up(pl.cdiv(V_pad, num_k), 128)
    V_pad = tile_k * num_k

    if tile_b is None:
        # Size the batch tile from a conservative VMEM budget (fits v5e's default
        # scoped limit with headroom; we also raise vmem_limit_bytes below).
        budget = 16 * 1024 * 1024
        fixed = 2 * tile_k * O_pad * in_itemsize                 # weight (double-buffered)
        per_row = 2 * tile_k * in_itemsize + 3 * O_pad * 4       # x(x2) + out(x2) + acc
        fit = max(8, (max(budget - fixed, 0) // per_row) // 8 * 8)
        tile_b = min(512, fit, _round_up(B, 8))
        # v7x megacore: prefer >= 2 grid steps along the parallel batch axis.
        if B >= 16:
            tile_b = min(tile_b, max(8, _round_up(pl.cdiv(B, 2), 8)))
    else:
        tile_b = max(8, _round_up(tile_b, 8))   # (8,128) sublane constraint
    B_pad = _round_up(B, tile_b)

    # --- Operand prep (pad only when needed, cast once) -----------------------
    x_c = x.astype(compute_dtype)
    if (B_pad, V_pad) != (B, V):
        x_c = jnp.pad(x_c, ((0, B_pad - B), (0, V_pad - V)))
    # Pre-transposed weight (V_pad, O_pad): standard MXU contraction layout.
    w_c = jnp.pad(weight.T.astype(compute_dtype), ((0, V_pad - V), (0, O_pad - O)))
    # Additive column mask: 0 for valid output columns, -1e30 for padded ones.
    bias = jnp.where(jnp.arange(O_pad) < O, 0.0, -1e30).astype(jnp.float32)
    bias = bias.reshape(1, O_pad)

    # --- Specs ----------------------------------------------------------------
    if num_k == 1:
        # Grid-invariant weight block: single-buffer it (halves its VMEM footprint).
        w_spec = pl.BlockSpec((tile_k, O_pad), lambda i, k: (k, 0),
                              pipeline_mode=pl.Buffered(1))
    else:
        w_spec = pl.BlockSpec((tile_k, O_pad), lambda i, k: (k, 0))

    bytes_accessed = (x_c.size * in_itemsize + w_c.size * in_itemsize
                      + bias.size * 4 + B_pad * O_pad * jnp.dtype(out_dtype).itemsize)

    out = pl.pallas_call(
        linear_softmax_kernel,
        out_shape=jax.ShapeDtypeStruct((B_pad, O_pad), out_dtype),
        grid=(B_pad // tile_b, num_k),
        in_specs=[
            pl.BlockSpec((tile_b, tile_k), lambda i, k: (i, k)),
            w_spec,
            pl.BlockSpec((1, O_pad), lambda i, k: (0, 0)),
        ],
        out_specs=pl.BlockSpec((tile_b, O_pad), lambda i, k: (i, 0)),
        scratch_shapes=[pltpu.VMEM((tile_b, O_pad), jnp.float32)],
        compiler_params=pltpu.CompilerParams(
            dimension_semantics=("parallel", "arbitrary"),
            vmem_limit_bytes=32 * 1024 * 1024,
        ),
        cost_estimate=pl.CostEstimate(
            flops=2 * B_pad * V_pad * O_pad,
            transcendentals=B_pad * O_pad,
            bytes_accessed=bytes_accessed,
        ),
    )(x_c, w_c, bias)

    return out[:B, :O]


def reference_forward(x, weight, compute_dtype=jnp.float32):
    h = jnp.dot(x.astype(compute_dtype), weight.astype(compute_dtype).T,
                preferred_element_type=jnp.float32)
    h = h - jnp.max(h, axis=1, keepdims=True)
    e = jnp.exp(h)
    return (e / jnp.sum(e, axis=1, keepdims=True)).astype(x.dtype)


if __name__ == "__main__":
    key = jax.random.PRNGKey(0)
    k_x, k_w = jax.random.split(key)

    batch = 8
    vector_size = 32
    output_size = 4  # matches NeuralNet default

    x = jax.random.normal(k_x, (batch, vector_size), dtype=jnp.float32)
    # deterministic init matching nn.Linear default: U(-1/sqrt(fan_in), 1/sqrt(fan_in))
    bound = 1.0 / (vector_size ** 0.5)
    weight = jax.random.uniform(
        k_w, (output_size, vector_size), dtype=jnp.float32,
        minval=-bound, maxval=bound,
    )

    out = jax.block_until_ready(neural_net_forward(x, weight))
    assert out.shape == (batch, output_size)

    # Reference built the same way the kernel computes (bf16 operands, f32 acc).
    ref_bf16 = reference_forward(x, weight, compute_dtype=jnp.bfloat16)
    assert jnp.allclose(out, ref_bf16, atol=2e-3, rtol=2e-3)
    # Sanity check against the full-f32 module semantics (bf16 quantization slack).
    ref_f32 = reference_forward(x, weight, compute_dtype=jnp.float32)
    assert jnp.allclose(out, ref_f32, atol=3e-2, rtol=3e-2)
    # Exact normalization: rows sum to 1 within f32 rounding.
    assert jnp.allclose(jnp.sum(out, axis=1), jnp.ones((batch,), jnp.float32), atol=1e-3)

    print("KERNEL_OK")
</pallas_src>

<mosaic_0001>
module attributes {stable_mosaic.version = 11 : i64} {
  func.func @linear_softmax_kernel(%arg0: i32, %arg1: i32, %arg2: memref<8x128xbf16, #tpu.memory_space<vmem>>, %arg3: memref<128x128xbf16, #tpu.memory_space<vmem>>, %arg4: memref<1x128xf32, #tpu.memory_space<vmem>>, %arg5: memref<8x128xf32, #tpu.memory_space<vmem>>, %arg6: memref<8x128xf32, #tpu.memory_space<vmem>>) attributes {dimension_semantics = [#tpu.dimension_semantics<parallel>, #tpu.dimension_semantics<arbitrary>], iteration_bounds = array<i64: 1, 1>, scalar_prefetch = 0 : i64, scratch_operands = 1 : i64, tpu.core_type = #tpu.core_type<tc>, window_params = [{transform_indices = @transform_0, window_bounds = array<i64: 8, 128>}, {pipeline_mode = #tpu.pipeline_mode<synchronous>, transform_indices = @transform_1, window_bounds = array<i64: 128, 128>}, {pipeline_mode = #tpu.pipeline_mode<synchronous>, transform_indices = @transform_2, window_bounds = array<i64: 1, 128>}, {transform_indices = @transform_3, window_bounds = array<i64: 8, 128>}]} {
    %c0_i32 = arith.constant 0 : i32
    %0 = arith.cmpi eq, %arg1, %c0_i32 : i32
    %1 = arith.extui %0 : i1 to i32
    %c0_i32_0 = arith.constant 0 : i32
    %2 = arith.cmpi ne, %1, %c0_i32_0 : i32
    scf.if %2 {
      %c0_10 = arith.constant 0 : index
      %c0_11 = arith.constant 0 : index
      %12 = vector.load %arg4[%c0_10, %c0_11] : memref<1x128xf32, #tpu.memory_space<vmem>>, vector<1x128xf32>
      %13 = vector.shape_cast %12 : vector<1x128xf32> to vector<1x128xf32>
      %14 = vector.broadcast %13 : vector<1x128xf32> to vector<8x128xf32>
      %c0_12 = arith.constant 0 : index
      %c0_13 = arith.constant 0 : index
      %15 = vector.load %arg6[%c0_12, %c0_13] : memref<8x128xf32, #tpu.memory_space<vmem>>, vector<8x128xf32>
      tpu.vector_store %arg6[%c0_12, %c0_13], %14 {strides = array<i32>} : memref<8x128xf32, #tpu.memory_space<vmem>>, vector<8x128xf32>,
    } else {
    }
    %c0 = arith.constant 0 : index
    %c0_1 = arith.constant 0 : index
    %3 = vector.load %arg6[%c0, %c0_1] : memref<8x128xf32, #tpu.memory_space<vmem>>, vector<8x128xf32>
    %c0_2 = arith.constant 0 : index
    %c0_3 = arith.constant 0 : index
    %4 = vector.load %arg2[%c0_2, %c0_3] : memref<8x128xbf16, #tpu.memory_space<vmem>>, vector<8x128xbf16>
    %c0_4 = arith.constant 0 : index
    %c0_5 = arith.constant 0 : index
    %5 = vector.load %arg3[%c0_4, %c0_5] : memref<128x128xbf16, #tpu.memory_space<vmem>>, vector<128x128xbf16>
    %cst = arith.constant dense<0.000000e+00> : vector<8x128xf32>
    %6 = tpu.matmul %4, %5, %cst {dimension_numbers = #tpu.dot_dimension_numbers<[1], [0], [0], [1], [0, 0, 1, 1], [], []>} : vector<8x128xbf16>, vector<128x128xbf16>, vector<8x128xf32> -> vector<8x128xf32>
    %7 = arith.addf %3, %6 : vector<8x128xf32>
    %c0_6 = arith.constant 0 : index
    %c0_7 = arith.constant 0 : index
    %8 = vector.load %arg6[%c0_6, %c0_7] : memref<8x128xf32, #tpu.memory_space<vmem>>, vector<8x128xf32>
    tpu.vector_store %arg6[%c0_6, %c0_7], %7 {strides = array<i32>} : memref<8x128xf32, #tpu.memory_space<vmem>>, vector<8x128xf32>,
    %c0_i32_8 = arith.constant 0 : i32
    %9 = arith.cmpi eq, %arg1, %c0_i32_8 : i32
    %10 = arith.extui %9 : i1 to i32
    %c0_i32_9 = arith.constant 0 : i32
    %11 = arith.cmpi ne, %10, %c0_i32_9 : i32
    scf.if %11 {
      %c0_10 = arith.constant 0 : index
      %c0_11 = arith.constant 0 : index
      %12 = vector.load %arg6[%c0_10, %c0_11] : memref<8x128xf32, #tpu.memory_space<vmem>>, vector<8x128xf32>
      %cst_12 = arith.constant dense<0xFF800000> : vector<8xf32>
      %13 = vector.multi_reduction <maximumf>, %12, %cst_12 [1] : vector<8x128xf32> to vector<8xf32>
      %14 = vector.shape_cast %13 : vector<8xf32> to vector<8x1xf32>
      %15 = vector.broadcast %14 : vector<8x1xf32> to vector<8x128xf32>
      %16 = arith.subf %12, %15 : vector<8x128xf32>
      %17 = math.exp %16 : vector<8x128xf32>
      %cst_13 = arith.constant dense<0.000000e+00> : vector<8xf32>
      %18 = vector.multi_reduction <add>, %17, %cst_13 [1] : vector<8x128xf32> to vector<8xf32>
      %19 = vector.shape_cast %18 : vector<8xf32> to vector<8x1xf32>
      %20 = vector.broadcast %19 : vector<8x1xf32> to vector<8x128xf32>
      %21 = arith.divf %17, %20 : vector<8x128xf32>
      %c0_14 = arith.constant 0 : index
      %c0_15 = arith.constant 0 : index
      %22 = vector.load %arg5[%c0_14, %c0_15] : memref<8x128xf32, #tpu.memory_space<vmem>>, vector<8x128xf32>
      tpu.vector_store %arg5[%c0_14, %c0_15], %21 {strides = array<i32>} : memref<8x128xf32, #tpu.memory_space<vmem>>, vector<8x128xf32>,
    } else {
    }
    return
  }
  func.func @transform_0(%arg0: i32, %arg1: i32) -> (i32, i32) {
    %c0_i32 = arith.constant 0 : i32
    return %arg0, %arg1 : i32, i32
  }
  func.func @transform_1(%arg0: i32, %arg1: i32) -> (i32, i32) {
    %c0_i32 = arith.constant 0 : i32
    %c0_i32_0 = arith.constant 0 : i32
    return %arg1, %c0_i32 : i32, i32
  }
  func.func @transform_2(%arg0: i32, %arg1: i32) -> (i32, i32) {
    %c0_i32 = arith.constant 0 : i32
    %c0_i32_0 = arith.constant 0 : i32
    %c0_i32_1 = arith.constant 0 : i32
    return %c0_i32, %c0_i32_0 : i32, i32
  }
  func.func @transform_3(%arg0: i32, %arg1: i32) -> (i32, i32) {
    %c0_i32 = arith.constant 0 : i32
    %c0_i32_0 = arith.constant 0 : i32
    return %arg0, %c0_i32 : i32, i32
  }
}

</mosaic_0001>

<llo_original>
// kernel: tpu_custom_call.1
$region0: #{tpu_custom_call.1}
  #allocation0 [shape = 'u32[]', space=smem, size = 0x4, offset = 0x4, fixed_abs, tag = 'smem constant byte address 0x4 - core index']
  #allocation1 [shape = 'u32[144,128]{1,0:T(1,128)}', space=vmem, size = 0x12000, scoped, tag = 'internal scratch']
  #allocation2 [shape = 'f32[8,128]{1,0:T(8,128)}', space=vmem, size = 0x1000, scoped, tag = 'scratch operand']
  %s0 = inlined_call_operand.hbm [shape: bf16[8,128], index: 0, kind: input, shape index: {}]
  %s1 = inlined_call_operand.hbm [shape: bf16[128,128], index: 1, kind: input, shape index: {}]
  %s2 = inlined_call_operand.vmem [shape: f32[1,128], index: 2, kind: input, shape index: {}]
  %s3 = inlined_call_operand.hbm [shape: f32[8,128], index: 3, kind: output, shape index: {}]
  %s4 = sld [smem:[#allocation0]]
  $region38: #{tpu_custom_call.1} parent=0
    _
  %s6 = ssub.s32 1, %s4
  %s7 = scalar_select 0, %s6, %s4
  $region1: #{tpu_custom_call.1} parent=0
    #allocation3 [shape = 'u8[2048]{0}', space=vmem, size = 0x800, scoped, tag = 'input window, operand 0, single buffered']
    #allocation4 [shape = 's32[1]{0}', space=sflag, size = 0x4, scoped, tag = 'scoped memory for tpu_custom_call.1']
    #allocation5 [shape = 's32[1]{0}', space=sflag, size = 0x4, scoped, tag = 'scoped memory for tpu_custom_call.1']
    #allocation6 [shape = 'u8[32768]{0}', space=vmem, size = 0x8000, scoped, tag = 'input window, operand 1, single buffered']
    #allocation7 [shape = 's32[1]{0}', space=sflag, size = 0x4, scoped, tag = 'scoped memory for tpu_custom_call.1']
    #allocation8 [shape = 'u8[4096]{0}', space=vmem, size = 0x1000, scoped, tag = 'output window, operand 0, single buffered']
    %8 = vsyncpa [#allocation4], 0
    %9 = vsyncpa [#allocation7], 0
    %10 = vsyncpa [#allocation5], 0
    // Predicated region
    $region2: #{tpu_custom_call.1} parent=1 // pred_check
      _
    $region3: #{tpu_custom_call.1} parent=1 // pred_check_branch
      %12 = sbr.rel (0) target = $region5
    $region4: #{tpu_custom_call.1} parent=1 // pred_region
      %s14 = ssub.s32 64, 64
      %15 = vsyncadd [#allocation4], %s14
      %s17 = sshll.u32 [#allocation3], 4
      %s18 = int_to_ptr.vmem [resolvable:$true] %s17
      %20 = dma.hbm_to_vmem [thread:$0]  %s0, 64, %s18, [#allocation4]
    $region5: #{tpu_custom_call.1} parent=1 // pred_fallthru
      _
    // Predicated region
    $region6: #{tpu_custom_call.1} parent=1 // pred_check
      _
    $region7: #{tpu_custom_call.1} parent=1 // pred_check_branch
      %22 = sbr.rel (0) target = $region9
    $region8: #{tpu_custom_call.1} parent=1 // pred_region
      %s24 = ssub.s32 1024, 1024
      %25 = vsyncadd [#allocation7], %s24
      %s26 = sshll.u32 [#allocation6], 4
      %s27 = int_to_ptr.vmem [resolvable:$true] %s26
      %32 = dma.hbm_to_vmem [thread:$0]  %s1, 1024, %s27, [#allocation7], 64, 64, 4
    $region9: #{tpu_custom_call.1} parent=1 // pred_fallthru
      _
    // Predicated region
    $region10: #{tpu_custom_call.1} parent=1 // pred_check
      _
    $region11: #{tpu_custom_call.1} parent=1 // pred_check_branch
      %34 = sbr.rel (0) target = $region13
    $region12: #{tpu_custom_call.1} parent=1 // pred_region
      _
    $region13: #{tpu_custom_call.1} parent=1 // pred_fallthru
      _
    // Predicated region
    $region14: #{tpu_custom_call.1} parent=1 // pred_check
      _
    $region15: #{tpu_custom_call.1} parent=1 // pred_check_branch
      %36 = sbr.rel (0) target = $region17
    $region16: #{tpu_custom_call.1} parent=1 // pred_region
      %37 = dma.done [#allocation4], 64
    $region17: #{tpu_custom_call.1} parent=1 // pred_fallthru
      _
    // Predicated region
    $region18: #{tpu_custom_call.1} parent=1 // pred_check
      _
    $region19: #{tpu_custom_call.1} parent=1 // pred_check_branch
      %39 = sbr.rel (0) target = $region21
    $region20: #{tpu_custom_call.1} parent=1 // pred_region
      %40 = dma.done [#allocation7], 1024
    $region21: #{tpu_custom_call.1} parent=1 // pred_fallthru
      _
    %p42 = scmp.eq.s32.totalorder 0, 0
    // Predicated region
    $region22: #{tpu_custom_call.1} parent=1 // pred_check
      %p43 = pneg %p42
    $region23: #{tpu_custom_call.1} parent=1 // pred_check_branch
      %45 = sbr.rel (%p43) target = $region25
    $region24: #{tpu_custom_call.1} parent=1 // pred_region
      %v46 = vld [vmem:[%s2] sm:$0x1]
      %v48 = vlaneseq
      %v49 = vshrl.u32 %v48, 7
      %v50 = vsub.s32 0, %v49
      %v51 = vrot.slane %v46, %v50
      %53 = vst [vmem:[#allocation2] sm:$0xff] %v51
    $region25: #{tpu_custom_call.1} parent=1 // pred_fallthru
      _
    %v54 = vld [vmem:[#allocation2] sm:$0xff]
    %v55 = vld [vmem:[#allocation3] sm:$0xf]
    %v56 = vld [vmem:[#allocation6] sm:$0xf]
    %v57 = vld [vmem:[#allocation6 + $0x4] sm:$0xf]
    %v58 = vld [vmem:[#allocation6 + $0x8] sm:$0xf]
    %v59 = vld [vmem:[#allocation6 + $0xc] sm:$0xf]
    %v60 = vld [vmem:[#allocation6 + $0x10] sm:$0xf]
    %v61 = vld [vmem:[#allocation6 + $0x14] sm:$0xf]
    %v62 = vld [vmem:[#allocation6 + $0x18] sm:$0xf]
    %v63 = vld [vmem:[#allocation6 + $0x1c] sm:$0xf]
    %v64 = vld [vmem:[#allocation6 + $0x20] sm:$0xf]
    %v65 = vld [vmem:[#allocation6 + $0x24] sm:$0xf]
    %v66 = vld [vmem:[#allocation6 + $0x28] sm:$0xf]
    %v67 = vld [vmem:[#allocation6 + $0x2c] sm:$0xf]
    %v68 = vld [vmem:[#allocation6 + $0x30] sm:$0xf]
    %v69 = vld [vmem:[#allocation6 + $0x34] sm:$0xf]
    %v70 = vld [vmem:[#allocation6 + $0x38] sm:$0xf]
    %v71 = vld [vmem:[#allocation6 + $0x3c] sm:$0xf]
    %v88 = vunpack.c.l.b16 %v56
    %v89 = vunpack.c.l.b16 %v57
    %v90 = vunpack.c.l.b16 %v58
    %v91 = vunpack.c.l.b16 %v59
    %v92 = vunpack.c.l.b16 %v60
    %v93 = vunpack.c.l.b16 %v61
    %v94 = vunpack.c.l.b16 %v62
    %v95 = vunpack.c.l.b16 %v63
    %v96 = vunpack.c.l.b16 %v64
    %v97 = vunpack.c.l.b16 %v65
    %v98 = vunpack.c.l.b16 %v66
    %v99 = vunpack.c.l.b16 %v67
    %v100 = vunpack.c.l.b16 %v68
    %v101 = vunpack.c.l.b16 %v69
    %v102 = vunpack.c.l.b16 %v70
    %v103 = vunpack.c.l.b16 %v71
    %v104 = vpack.c.b16 %v89, %v88
    %v105 = vpack.c.b16 %v91, %v90
    %v106 = vpack.c.b16 %v93, %v92
    %v107 = vpack.c.b16 %v95, %v94
    %v108 = vpack.c.b16 %v97, %v96
    %v109 = vpack.c.b16 %v99, %v98
    %v110 = vpack.c.b16 %v101, %v100
    %v111 = vpack.c.b16 %v103, %v102
    %120 = vmatprep.subr.bf16.mxu0 0
    %121 = vmatpush1.bf16.msra.mxu0 %v104
    %122 = vmatprep.subr.bf16.mxu0 0
    %123 = vmatpush1.bf16.msra.mxu0 %v105
    %124 = vmatprep.subr.bf16.mxu0 0
    %125 = vmatpush1.bf16.msra.mxu0 %v106
    %126 = vmatprep.subr.bf16.mxu0 0
    %127 = vmatpush1.bf16.msra.mxu0 %v107
    %128 = vmatprep.subr.bf16.mxu0 0
    %129 = vmatpush1.bf16.msra.mxu0 %v108
    %130 = vmatprep.subr.bf16.mxu0 0
    %131 = vmatpush1.bf16.msra.mxu0 %v109
    %132 = vmatprep.subr.bf16.mxu0 0
    %133 = vmatpush1.bf16.msra.mxu0 %v110
    %134 = vmatprep.subr.bf16.mxu0 0
    %135 = vmatpush1.bf16.msra.mxu0 %v111
    %136 = vmatprep.subr.bf16.mxu0 0
    %137 = vmatpush1.bf16.msra.mxu0 0
    %138 = vmatprep.subr.bf16.mxu0 0
    %139 = vmatpush1.bf16.msra.mxu0 0
    %140 = vmatprep.subr.bf16.mxu0 0
    %141 = vmatpush1.bf16.msra.mxu0 0
    %142 = vmatprep.subr.bf16.mxu0 0
    %143 = vmatpush1.bf16.msra.mxu0 0
    %144 = vmatprep.subr.bf16.mxu0 0
    %145 = vmatpush1.bf16.msra.mxu0 0
    %146 = vmatprep.subr.bf16.mxu0 0
    %147 = vmatpush1.bf16.msra.mxu0 0
    %148 = vmatprep.subr.bf16.mxu0 0
    %149 = vmatpush1.bf16.msra.mxu0 0
    %150 = vmatprep.subr.bf16.mxu0 0
    %151 = vmatpush1.bf16.msra.mxu0 0
    %152 = vmatprep.mubr.bf16.mxu0 0
    %153 = vmatmul.mubr.bf16.gmra.mrb[0].mxu0 %v55
    %v154 = vpop.f32.mrb[0].mxu0
    %v155 = vadd.f32 0.0, %v154
    %v156 = vpop.f32.mrb[0].mxu0
    %v157 = vpop.f32.mrb[0].mxu0
    %v158 = vpop.f32.mrb[0].mxu0
    %159 = vdwg.mxu0
    %v160 = vadd.f32 %v54, %v155
    %161 = vst [vmem:[#allocation2] sm:$0xff] %v160
    // Predicated region
    $region26: #{tpu_custom_call.1} parent=1 // pred_check
      %p162 = pneg %p42
    $region27: #{tpu_custom_call.1} parent=1 // pred_check_branch
      %164 = sbr.rel (%p162) target = $region29
    $region28: #{tpu_custom_call.1} parent=1 // pred_region
      %v165 = vld [vmem:[#allocation2] sm:$0xff]
      %166 = vmax.xlane.f32.xlu0 %v165
      %v167 = vpop.xlane.xlu0 %166
      %v168 = vsub.f32 %v165, %v167
      %v169 = vmul.f32 %v168, 1.442695
      %v170 = vpow.pop %v169
      %171 = vadd.xlane.f32.xlu0 %v170
      %v172 = vpop.xlane.xlu0 %171
      %v173 = vrcp.pop %v172
      %v174 = vmul.f32 %v170, %v173
      %175 = vst [vmem:[#allocation8] sm:$0xff] %v174
    $region29: #{tpu_custom_call.1} parent=1 // pred_fallthru
      _
    // Predicated region
    $region30: #{tpu_custom_call.1} parent=1 // pred_check
      _
    $region31: #{tpu_custom_call.1} parent=1 // pred_check_branch
      %177 = sbr.rel (0) target = $region33
    $region32: #{tpu_custom_call.1} parent=1 // pred_region
      %s179 = ssub.s32 128, 128
      %180 = vsyncadd [#allocation5], %s179
      %s182 = sshll.u32 [#allocation8], 4
      %s183 = int_to_ptr.vmem [resolvable:$true] %s182
      %185 = dma.vmem_to_hbm [thread:$0]  %s183, 128, %s3, [#allocation5]
    $region33: #{tpu_custom_call.1} parent=1 // pred_fallthru
      _
    // Predicated region
    $region34: #{tpu_custom_call.1} parent=1 // pred_check
      _
    $region35: #{tpu_custom_call.1} parent=1 // pred_check_branch
      %187 = sbr.rel (0) target = $region37
    $region36: #{tpu_custom_call.1} parent=1 // pred_region
      %188 = dma.done [#allocation5], 128
    $region37: #{tpu_custom_call.1} parent=1 // pred_fallthru
      _
    %189 = vsyncpa [#allocation4], 1
    %190 = vsyncpa [#allocation7], 1
    %191 = vsyncpa [#allocation5], 1

</llo_original>
